<compile_context>
chip_gen: v6e
topology: v6e:2x2x1
jax: 0.10.0
libtpu: 0.0.40
codegen_flags: <defaults>
</compile_context>

<pallas_src>
import numpy as np
import jax
import jax.numpy as jnp
from jax.experimental import pallas as pl
from jax.experimental.pallas import tpu as pltpu


def _make_spline_kernel(knots, order, n_cp):
    """Builds the kernel body with knots baked in as compile-time scalars."""
    t = [float(v) for v in np.asarray(knots).reshape(-1)]
    n_knots = len(t)
    k = order - 1  # spline degree

    def kernel(cp_ref, x_ref, y_ref):
        x = x_ref[...]  # (block_rows, 128) f32 — sublane-dense tile

        # ---- degree-0 basis; `None` marks an identically-zero row --------
        B = []
        for i in range(n_knots - 1):
            special = (i == n_knots - order - 1)
            if t[i] == t[i + 1]:
                # empty half-open interval -> statically zero
                if special:
                    # torch endpoint fix-up still applies
                    B.append(jnp.where(x == t[-1], 1.0, 0.0))
                else:
                    B.append(None)
            else:
                a = jnp.where(jnp.logical_and(t[i] <= x, x < t[i + 1]), 1.0, 0.0)
                if special:
                    a = jnp.where(x == t[-1], 1.0, a)
                B.append(a)

        # ---- shared-weight Cox-de Boor step helpers -----------------------
        def w_factory(d):
            wcache = {}

            def w(i):
                if i not in wcache:
                    denom = t[i + d] - t[i]
                    if denom == 0.0:
                        wcache[i] = None              # torch zero-denominator branch
                    else:
                        wcache[i] = (x - t[i]) * (1.0 / denom)  # reciprocal mult
                return wcache[i]

            return w

        def term(Bprev, w, i):
            # c1 = (x - t[i])/(t[i+d]-t[i]) * B[i]          = w_i       * B[i]
            # c2 = (t[i+d+1]-x)/(t[i+d+1]-t[i+1]) * B[i+1]  = (1-w_{i+1}) * B[i+1]
            c1 = None
            if Bprev[i] is not None:
                wi = w(i)
                if wi is not None:
                    c1 = wi * Bprev[i]
            c2 = None
            if Bprev[i + 1] is not None:
                wi1 = w(i + 1)
                if wi1 is not None:
                    c2 = (1.0 - wi1) * Bprev[i + 1]
            if c1 is None:
                return c2
            if c2 is None:
                return c1
            return c1 + c2

        # ---- intermediate degrees 1..k-1 (fully unrolled) -----------------
        for d in range(1, k):
            w = w_factory(d)
            B = [term(B, w, i) for i in range(n_knots - 1 - d)]

        # ---- final degree k: fold control points into the reduction -------
        y = None
        if k == 0:
            finals = ((i, B[i]) for i in range(n_cp))
        else:
            w = w_factory(k)
            finals = ((i, term(B, w, i)) for i in range(n_cp))
        for i, bterm in finals:
            if bterm is None:
                continue
            contrib = bterm * cp_ref[i]       # scalar SMEM read, broadcast mul
            y = contrib if y is None else y + contrib
        if y is None:
            y = jnp.zeros_like(x)
        y_ref[...] = y

    return kernel


def spline_forward(x, knots, control_points, order=4, max_block_rows=256,
                   lanes=128):
    """Evaluate the spline at 1-D points x. Returns shape (N,) like torch."""
    x = jnp.asarray(x, jnp.float32)
    control_points = jnp.asarray(control_points, jnp.float32).reshape(-1)
    n = int(x.shape[0])
    n_cp = int(control_points.shape[0])

    # Lay the N points out as (rows, 128): lanes fast, sublanes filled.
    rows = max(1, pl.cdiv(n, lanes))
    rows8 = pl.cdiv(rows, 8) * 8                 # keep block rows a multiple of 8
    block_rows = min(max(8, max_block_rows), rows8)
    rows_padded = pl.cdiv(rows8, block_rows) * block_rows
    npad = rows_padded * lanes
    grid = rows_padded // block_rows

    # Padded tail points evaluate at x=0 (valid for clamped knots); sliced off.
    x2 = jnp.zeros((npad,), jnp.float32).at[:n].set(x).reshape(rows_padded, lanes)

    kernel = _make_spline_kernel(knots, order, n_cp)

    y2 = pl.pallas_call(
        kernel,
        out_shape=jax.ShapeDtypeStruct((rows_padded, lanes), jnp.float32),
        grid=(grid,),
        in_specs=[
            pl.BlockSpec(memory_space=pltpu.MemorySpace.SMEM),     # control points
            pl.BlockSpec((block_rows, lanes), lambda i: (i, 0)),   # x points
        ],
        out_specs=pl.BlockSpec((block_rows, lanes), lambda i: (i, 0)),
        compiler_params=pltpu.CompilerParams(
            dimension_semantics=("parallel",)),
    )(control_points, x2)

    return y2.reshape(-1)[:n]


def _ref_spline(x, knots, cp, order):
    """Pure-numpy replica of the torch forward (for verification)."""
    t = np.asarray(knots, np.float32)
    x = np.asarray(x, np.float32)
    cp = np.asarray(cp, np.float32)
    k = order - 1

    def basis(deg, i):
        if deg == 0:
            a = np.where(np.logical_and(t[i] <= x, x < t[i + 1]), 1.0, 0.0)
            if i == len(t) - order - 1:
                a = np.where(x == t[-1], 1.0, a)
            return a.astype(np.float32)
        if t[i + deg] == t[i]:
            c1 = np.zeros_like(x)
        else:
            c1 = (x - t[i]) / (t[i + deg] - t[i]) * basis(deg - 1, i)
        if t[i + deg + 1] == t[i + 1]:
            c2 = np.zeros_like(x)
        else:
            c2 = (t[i + deg + 1] - x) / (t[i + deg + 1] - t[i + 1]) * basis(deg - 1, i + 1)
        return (c1 + c2).astype(np.float32)

    B = np.stack([basis(k, i) for i in range(len(cp))], axis=1)  # (N, n_cp)
    return (B * cp).sum(axis=1)


if __name__ == "__main__":
    order = 4  # cubic spline (degree k = 3)

    # Clamped knot vector with order-multiplicity end knots (length 12).
    knots = np.concatenate([
        np.zeros(3, np.float32),
        np.linspace(0.0, 1.0, 6, dtype=np.float32),
        np.ones(3, np.float32),
    ])
    n_cp = len(knots) - order  # 8 control points

    key = jax.random.PRNGKey(0)
    kx, kc = jax.random.split(key)
    n_points = 2048  # 16 rows of 128 lanes -> one (16,128) sublane-dense block
    x = jax.random.uniform(kx, (n_points,), dtype=jnp.float32)
    x = x.at[-1].set(1.0)  # exercise the right-endpoint special case
    control_points = jax.random.normal(kc, (n_cp,), dtype=jnp.float32)

    y = spline_forward(x, knots, control_points, order=order)
    y = jax.block_until_ready(y)

    y_ref = _ref_spline(np.asarray(x), knots, np.asarray(control_points), order)
    assert y.shape == (n_points,)
    assert np.allclose(np.asarray(y), y_ref, atol=1e-5, rtol=1e-4), (
        "mismatch", np.max(np.abs(np.asarray(y) - y_ref)))

    print("KERNEL_OK")
</pallas_src>

<mosaic_0001>
module attributes {stable_mosaic.version = 11 : i64} {
  func.func @kernel(%arg0: i32, %arg1: memref<8xf32, #tpu.memory_space<smem>>, %arg2: memref<16x128xf32, #tpu.memory_space<vmem>>, %arg3: memref<16x128xf32, #tpu.memory_space<vmem>>) attributes {dimension_semantics = [#tpu.dimension_semantics<parallel>], iteration_bounds = array<i64: 1>, scalar_prefetch = 0 : i64, scratch_operands = 0 : i64, tpu.core_type = #tpu.core_type<tc>, window_params = [{transform_indices = @transform_0, window_bounds = array<i64: 8>}, {transform_indices = @transform_1, window_bounds = array<i64: 16, 128>}, {transform_indices = @transform_2, window_bounds = array<i64: 16, 128>}]} {
    %c0 = arith.constant 0 : index
    %c0_0 = arith.constant 0 : index
    %0 = vector.load %arg2[%c0, %c0_0] : memref<16x128xf32, #tpu.memory_space<vmem>>, vector<16x128xf32>
    %cst = arith.constant 0.000000e+00 : f32
    %1 = vector.broadcast %cst : f32 to vector<16x128xf32>
    %2 = arith.cmpf oge, %0, %1 : vector<16x128xf32>
    %cst_1 = arith.constant 2.000000e-01 : f32
    %3 = vector.broadcast %cst_1 : f32 to vector<16x128xf32>
    %4 = arith.cmpf olt, %0, %3 : vector<16x128xf32>
    %5 = arith.andi %2, %4 : vector<16x128xi1>
    %cst_2 = arith.constant 1.000000e+00 : f32
    %cst_3 = arith.constant 0.000000e+00 : f32
    %6 = vector.broadcast %cst_2 : f32 to vector<16x128xf32>
    %7 = vector.broadcast %cst_3 : f32 to vector<16x128xf32>
    %8 = arith.select %5, %6, %7 : vector<16x128xi1>, vector<16x128xf32>
    %cst_4 = arith.constant 2.000000e-01 : f32
    %9 = vector.broadcast %cst_4 : f32 to vector<16x128xf32>
    %10 = arith.cmpf oge, %0, %9 : vector<16x128xf32>
    %cst_5 = arith.constant 4.000000e-01 : f32
    %11 = vector.broadcast %cst_5 : f32 to vector<16x128xf32>
    %12 = arith.cmpf olt, %0, %11 : vector<16x128xf32>
    %13 = arith.andi %10, %12 : vector<16x128xi1>
    %cst_6 = arith.constant 1.000000e+00 : f32
    %cst_7 = arith.constant 0.000000e+00 : f32
    %14 = vector.broadcast %cst_6 : f32 to vector<16x128xf32>
    %15 = vector.broadcast %cst_7 : f32 to vector<16x128xf32>
    %16 = arith.select %13, %14, %15 : vector<16x128xi1>, vector<16x128xf32>
    %cst_8 = arith.constant 4.000000e-01 : f32
    %17 = vector.broadcast %cst_8 : f32 to vector<16x128xf32>
    %18 = arith.cmpf oge, %0, %17 : vector<16x128xf32>
    %cst_9 = arith.constant 6.000000e-01 : f32
    %19 = vector.broadcast %cst_9 : f32 to vector<16x128xf32>
    %20 = arith.cmpf olt, %0, %19 : vector<16x128xf32>
    %21 = arith.andi %18, %20 : vector<16x128xi1>
    %cst_10 = arith.constant 1.000000e+00 : f32
    %cst_11 = arith.constant 0.000000e+00 : f32
    %22 = vector.broadcast %cst_10 : f32 to vector<16x128xf32>
    %23 = vector.broadcast %cst_11 : f32 to vector<16x128xf32>
    %24 = arith.select %21, %22, %23 : vector<16x128xi1>, vector<16x128xf32>
    %cst_12 = arith.constant 6.000000e-01 : f32
    %25 = vector.broadcast %cst_12 : f32 to vector<16x128xf32>
    %26 = arith.cmpf oge, %0, %25 : vector<16x128xf32>
    %cst_13 = arith.constant 8.000000e-01 : f32
    %27 = vector.broadcast %cst_13 : f32 to vector<16x128xf32>
    %28 = arith.cmpf olt, %0, %27 : vector<16x128xf32>
    %29 = arith.andi %26, %28 : vector<16x128xi1>
    %cst_14 = arith.constant 1.000000e+00 : f32
    %cst_15 = arith.constant 0.000000e+00 : f32
    %30 = vector.broadcast %cst_14 : f32 to vector<16x128xf32>
    %31 = vector.broadcast %cst_15 : f32 to vector<16x128xf32>
    %32 = arith.select %29, %30, %31 : vector<16x128xi1>, vector<16x128xf32>
    %cst_16 = arith.constant 8.000000e-01 : f32
    %33 = vector.broadcast %cst_16 : f32 to vector<16x128xf32>
    %34 = arith.cmpf oge, %0, %33 : vector<16x128xf32>
    %cst_17 = arith.constant 1.000000e+00 : f32
    %35 = vector.broadcast %cst_17 : f32 to vector<16x128xf32>
    %36 = arith.cmpf olt, %0, %35 : vector<16x128xf32>
    %37 = arith.andi %34, %36 : vector<16x128xi1>
    %cst_18 = arith.constant 1.000000e+00 : f32
    %cst_19 = arith.constant 0.000000e+00 : f32
    %38 = vector.broadcast %cst_18 : f32 to vector<16x128xf32>
    %39 = vector.broadcast %cst_19 : f32 to vector<16x128xf32>
    %40 = arith.select %37, %38, %39 : vector<16x128xi1>, vector<16x128xf32>
    %cst_20 = arith.constant 1.000000e+00 : f32
    %41 = vector.broadcast %cst_20 : f32 to vector<16x128xf32>
    %42 = arith.cmpf oeq, %0, %41 : vector<16x128xf32>
    %cst_21 = arith.constant 1.000000e+00 : f32
    %43 = vector.broadcast %cst_21 : f32 to vector<16x128xf32>
    %44 = arith.select %42, %43, %40 : vector<16x128xi1>, vector<16x128xf32>
    %cst_22 = arith.constant 0.000000e+00 : f32
    %45 = vector.broadcast %cst_22 : f32 to vector<16x128xf32>
    %46 = arith.subf %0, %45 : vector<16x128xf32>
    %cst_23 = arith.constant 5.000000e+00 : f32
    %47 = vector.broadcast %cst_23 : f32 to vector<16x128xf32>
    %48 = arith.mulf %46, %47 : vector<16x128xf32>
    %cst_24 = arith.constant 1.000000e+00 : f32
    %49 = vector.broadcast %cst_24 : f32 to vector<16x128xf32>
    %50 = arith.subf %49, %48 : vector<16x128xf32>
    %51 = arith.mulf %50, %8 : vector<16x128xf32>
    %52 = arith.mulf %48, %8 : vector<16x128xf32>
    %cst_25 = arith.constant 2.000000e-01 : f32
    %53 = vector.broadcast %cst_25 : f32 to vector<16x128xf32>
    %54 = arith.subf %0, %53 : vector<16x128xf32>
    %cst_26 = arith.constant 5.000000e+00 : f32
    %55 = vector.broadcast %cst_26 : f32 to vector<16x128xf32>
    %56 = arith.mulf %54, %55 : vector<16x128xf32>
    %cst_27 = arith.constant 1.000000e+00 : f32
    %57 = vector.broadcast %cst_27 : f32 to vector<16x128xf32>
    %58 = arith.subf %57, %56 : vector<16x128xf32>
    %59 = arith.mulf %58, %16 : vector<16x128xf32>
    %60 = arith.addf %52, %59 : vector<16x128xf32>
    %61 = arith.mulf %56, %16 : vector<16x128xf32>
    %cst_28 = arith.constant 4.000000e-01 : f32
    %62 = vector.broadcast %cst_28 : f32 to vector<16x128xf32>
    %63 = arith.subf %0, %62 : vector<16x128xf32>
    %cst_29 = arith.constant 4.99999952 : f32
    %64 = vector.broadcast %cst_29 : f32 to vector<16x128xf32>
    %65 = arith.mulf %63, %64 : vector<16x128xf32>
    %cst_30 = arith.constant 1.000000e+00 : f32
    %66 = vector.broadcast %cst_30 : f32 to vector<16x128xf32>
    %67 = arith.subf %66, %65 : vector<16x128xf32>
    %68 = arith.mulf %67, %24 : vector<16x128xf32>
    %69 = arith.addf %61, %68 : vector<16x128xf32>
    %70 = arith.mulf %65, %24 : vector<16x128xf32>
    %cst_31 = arith.constant 6.000000e-01 : f32
    %71 = vector.broadcast %cst_31 : f32 to vector<16x128xf32>
    %72 = arith.subf %0, %71 : vector<16x128xf32>
    %cst_32 = arith.constant 5.00000048 : f32
    %73 = vector.broadcast %cst_32 : f32 to vector<16x128xf32>
    %74 = arith.mulf %72, %73 : vector<16x128xf32>
    %cst_33 = arith.constant 1.000000e+00 : f32
    %75 = vector.broadcast %cst_33 : f32 to vector<16x128xf32>
    %76 = arith.subf %75, %74 : vector<16x128xf32>
    %77 = arith.mulf %76, %32 : vector<16x128xf32>
    %78 = arith.addf %70, %77 : vector<16x128xf32>
    %79 = arith.mulf %74, %32 : vector<16x128xf32>
    %cst_34 = arith.constant 8.000000e-01 : f32
    %80 = vector.broadcast %cst_34 : f32 to vector<16x128xf32>
    %81 = arith.subf %0, %80 : vector<16x128xf32>
    %cst_35 = arith.constant 5.00000048 : f32
    %82 = vector.broadcast %cst_35 : f32 to vector<16x128xf32>
    %83 = arith.mulf %81, %82 : vector<16x128xf32>
    %cst_36 = arith.constant 1.000000e+00 : f32
    %84 = vector.broadcast %cst_36 : f32 to vector<16x128xf32>
    %85 = arith.subf %84, %83 : vector<16x128xf32>
    %86 = arith.mulf %85, %44 : vector<16x128xf32>
    %87 = arith.addf %79, %86 : vector<16x128xf32>
    %88 = arith.mulf %83, %44 : vector<16x128xf32>
    %cst_37 = arith.constant 0.000000e+00 : f32
    %89 = vector.broadcast %cst_37 : f32 to vector<16x128xf32>
    %90 = arith.subf %0, %89 : vector<16x128xf32>
    %cst_38 = arith.constant 5.000000e+00 : f32
    %91 = vector.broadcast %cst_38 : f32 to vector<16x128xf32>
    %92 = arith.mulf %90, %91 : vector<16x128xf32>
    %cst_39 = arith.constant 1.000000e+00 : f32
    %93 = vector.broadcast %cst_39 : f32 to vector<16x128xf32>
    %94 = arith.subf %93, %92 : vector<16x128xf32>
    %95 = arith.mulf %94, %51 : vector<16x128xf32>
    %96 = arith.mulf %92, %51 : vector<16x128xf32>
    %cst_40 = arith.constant 0.000000e+00 : f32
    %97 = vector.broadcast %cst_40 : f32 to vector<16x128xf32>
    %98 = arith.subf %0, %97 : vector<16x128xf32>
    %cst_41 = arith.constant 2.500000e+00 : f32
    %99 = vector.broadcast %cst_41 : f32 to vector<16x128xf32>
    %100 = arith.mulf %98, %99 : vector<16x128xf32>
    %cst_42 = arith.constant 1.000000e+00 : f32
    %101 = vector.broadcast %cst_42 : f32 to vector<16x128xf32>
    %102 = arith.subf %101, %100 : vector<16x128xf32>
    %103 = arith.mulf %102, %60 : vector<16x128xf32>
    %104 = arith.addf %96, %103 : vector<16x128xf32>
    %105 = arith.mulf %100, %60 : vector<16x128xf32>
    %cst_43 = arith.constant 2.000000e-01 : f32
    %106 = vector.broadcast %cst_43 : f32 to vector<16x128xf32>
    %107 = arith.subf %0, %106 : vector<16x128xf32>
    %cst_44 = arith.constant 2.49999976 : f32
    %108 = vector.broadcast %cst_44 : f32 to vector<16x128xf32>
    %109 = arith.mulf %107, %108 : vector<16x128xf32>
    %cst_45 = arith.constant 1.000000e+00 : f32
    %110 = vector.broadcast %cst_45 : f32 to vector<16x128xf32>
    %111 = arith.subf %110, %109 : vector<16x128xf32>
    %112 = arith.mulf %111, %69 : vector<16x128xf32>
    %113 = arith.addf %105, %112 : vector<16x128xf32>
    %114 = arith.mulf %109, %69 : vector<16x128xf32>
    %cst_46 = arith.constant 4.000000e-01 : f32
    %115 = vector.broadcast %cst_46 : f32 to vector<16x128xf32>
    %116 = arith.subf %0, %115 : vector<16x128xf32>
    %cst_47 = arith.constant 2.500000e+00 : f32
    %117 = vector.broadcast %cst_47 : f32 to vector<16x128xf32>
    %118 = arith.mulf %116, %117 : vector<16x128xf32>
    %cst_48 = arith.constant 1.000000e+00 : f32
    %119 = vector.broadcast %cst_48 : f32 to vector<16x128xf32>
    %120 = arith.subf %119, %118 : vector<16x128xf32>
    %121 = arith.mulf %120, %78 : vector<16x128xf32>
    %122 = arith.addf %114, %121 : vector<16x128xf32>
    %123 = arith.mulf %118, %78 : vector<16x128xf32>
    %cst_49 = arith.constant 6.000000e-01 : f32
    %124 = vector.broadcast %cst_49 : f32 to vector<16x128xf32>
    %125 = arith.subf %0, %124 : vector<16x128xf32>
    %cst_50 = arith.constant 2.50000024 : f32
    %126 = vector.broadcast %cst_50 : f32 to vector<16x128xf32>
    %127 = arith.mulf %125, %126 : vector<16x128xf32>
    %cst_51 = arith.constant 1.000000e+00 : f32
    %128 = vector.broadcast %cst_51 : f32 to vector<16x128xf32>
    %129 = arith.subf %128, %127 : vector<16x128xf32>
    %130 = arith.mulf %129, %87 : vector<16x128xf32>
    %131 = arith.addf %123, %130 : vector<16x128xf32>
    %132 = arith.mulf %127, %87 : vector<16x128xf32>
    %cst_52 = arith.constant 8.000000e-01 : f32
    %133 = vector.broadcast %cst_52 : f32 to vector<16x128xf32>
    %134 = arith.subf %0, %133 : vector<16x128xf32>
    %cst_53 = arith.constant 5.00000048 : f32
    %135 = vector.broadcast %cst_53 : f32 to vector<16x128xf32>
    %136 = arith.mulf %134, %135 : vector<16x128xf32>
    %cst_54 = arith.constant 1.000000e+00 : f32
    %137 = vector.broadcast %cst_54 : f32 to vector<16x128xf32>
    %138 = arith.subf %137, %136 : vector<16x128xf32>
    %139 = arith.mulf %138, %88 : vector<16x128xf32>
    %140 = arith.addf %132, %139 : vector<16x128xf32>
    %141 = arith.mulf %136, %88 : vector<16x128xf32>
    %cst_55 = arith.constant 0.000000e+00 : f32
    %142 = vector.broadcast %cst_55 : f32 to vector<16x128xf32>
    %143 = arith.subf %0, %142 : vector<16x128xf32>
    %cst_56 = arith.constant 5.000000e+00 : f32
    %144 = vector.broadcast %cst_56 : f32 to vector<16x128xf32>
    %145 = arith.mulf %143, %144 : vector<16x128xf32>
    %cst_57 = arith.constant 1.000000e+00 : f32
    %146 = vector.broadcast %cst_57 : f32 to vector<16x128xf32>
    %147 = arith.subf %146, %145 : vector<16x128xf32>
    %148 = arith.mulf %147, %95 : vector<16x128xf32>
    %c0_58 = arith.constant 0 : index
    %149 = memref.load %arg1[%c0_58] : memref<8xf32, #tpu.memory_space<smem>>
    %150 = vector.broadcast %149 : f32 to vector<16x128xf32>
    %151 = arith.mulf %148, %150 : vector<16x128xf32>
    %152 = arith.mulf %145, %95 : vector<16x128xf32>
    %cst_59 = arith.constant 0.000000e+00 : f32
    %153 = vector.broadcast %cst_59 : f32 to vector<16x128xf32>
    %154 = arith.subf %0, %153 : vector<16x128xf32>
    %cst_60 = arith.constant 2.500000e+00 : f32
    %155 = vector.broadcast %cst_60 : f32 to vector<16x128xf32>
    %156 = arith.mulf %154, %155 : vector<16x128xf32>
    %cst_61 = arith.constant 1.000000e+00 : f32
    %157 = vector.broadcast %cst_61 : f32 to vector<16x128xf32>
    %158 = arith.subf %157, %156 : vector<16x128xf32>
    %159 = arith.mulf %158, %104 : vector<16x128xf32>
    %160 = arith.addf %152, %159 : vector<16x128xf32>
    %c1 = arith.constant 1 : index
    %161 = memref.load %arg1[%c1] : memref<8xf32, #tpu.memory_space<smem>>
    %162 = vector.broadcast %161 : f32 to vector<16x128xf32>
    %163 = arith.mulf %160, %162 : vector<16x128xf32>
    %164 = arith.addf %151, %163 : vector<16x128xf32>
    %165 = arith.mulf %156, %104 : vector<16x128xf32>
    %cst_62 = arith.constant 0.000000e+00 : f32
    %166 = vector.broadcast %cst_62 : f32 to vector<16x128xf32>
    %167 = arith.subf %0, %166 : vector<16x128xf32>
    %cst_63 = arith.constant 1.66666663 : f32
    %168 = vector.broadcast %cst_63 : f32 to vector<16x128xf32>
    %169 = arith.mulf %167, %168 : vector<16x128xf32>
    %cst_64 = arith.constant 1.000000e+00 : f32
    %170 = vector.broadcast %cst_64 : f32 to vector<16x128xf32>
    %171 = arith.subf %170, %169 : vector<16x128xf32>
    %172 = arith.mulf %171, %113 : vector<16x128xf32>
    %173 = arith.addf %165, %172 : vector<16x128xf32>
    %c2 = arith.constant 2 : index
    %174 = memref.load %arg1[%c2] : memref<8xf32, #tpu.memory_space<smem>>
    %175 = vector.broadcast %174 : f32 to vector<16x128xf32>
    %176 = arith.mulf %173, %175 : vector<16x128xf32>
    %177 = arith.addf %164, %176 : vector<16x128xf32>
    %178 = arith.mulf %169, %113 : vector<16x128xf32>
    %cst_65 = arith.constant 2.000000e-01 : f32
    %179 = vector.broadcast %cst_65 : f32 to vector<16x128xf32>
    %180 = arith.subf %0, %179 : vector<16x128xf32>
    %cst_66 = arith.constant 1.66666663 : f32
    %181 = vector.broadcast %cst_66 : f32 to vector<16x128xf32>
    %182 = arith.mulf %180, %181 : vector<16x128xf32>
    %cst_67 = arith.constant 1.000000e+00 : f32
    %183 = vector.broadcast %cst_67 : f32 to vector<16x128xf32>
    %184 = arith.subf %183, %182 : vector<16x128xf32>
    %185 = arith.mulf %184, %122 : vector<16x128xf32>
    %186 = arith.addf %178, %185 : vector<16x128xf32>
    %c3 = arith.constant 3 : index
    %187 = memref.load %arg1[%c3] : memref<8xf32, #tpu.memory_space<smem>>
    %188 = vector.broadcast %187 : f32 to vector<16x128xf32>
    %189 = arith.mulf %186, %188 : vector<16x128xf32>
    %190 = arith.addf %177, %189 : vector<16x128xf32>
    %191 = arith.mulf %182, %122 : vector<16x128xf32>
    %cst_68 = arith.constant 4.000000e-01 : f32
    %192 = vector.broadcast %cst_68 : f32 to vector<16x128xf32>
    %193 = arith.subf %0, %192 : vector<16x128xf32>
    %cst_69 = arith.constant 1.66666663 : f32
    %194 = vector.broadcast %cst_69 : f32 to vector<16x128xf32>
    %195 = arith.mulf %193, %194 : vector<16x128xf32>
    %cst_70 = arith.constant 1.000000e+00 : f32
    %196 = vector.broadcast %cst_70 : f32 to vector<16x128xf32>
    %197 = arith.subf %196, %195 : vector<16x128xf32>
    %198 = arith.mulf %197, %131 : vector<16x128xf32>
    %199 = arith.addf %191, %198 : vector<16x128xf32>
    %c4 = arith.constant 4 : index
    %200 = memref.load %arg1[%c4] : memref<8xf32, #tpu.memory_space<smem>>
    %201 = vector.broadcast %200 : f32 to vector<16x128xf32>
    %202 = arith.mulf %199, %201 : vector<16x128xf32>
    %203 = arith.addf %190, %202 : vector<16x128xf32>
    %204 = arith.mulf %195, %131 : vector<16x128xf32>
    %cst_71 = arith.constant 6.000000e-01 : f32
    %205 = vector.broadcast %cst_71 : f32 to vector<16x128xf32>
    %206 = arith.subf %0, %205 : vector<16x128xf32>
    %cst_72 = arith.constant 2.50000024 : f32
    %207 = vector.broadcast %cst_72 : f32 to vector<16x128xf32>
    %208 = arith.mulf %206, %207 : vector<16x128xf32>
    %cst_73 = arith.constant 1.000000e+00 : f32
    %209 = vector.broadcast %cst_73 : f32 to vector<16x128xf32>
    %210 = arith.subf %209, %208 : vector<16x128xf32>
    %211 = arith.mulf %210, %140 : vector<16x128xf32>
    %212 = arith.addf %204, %211 : vector<16x128xf32>
    %c5 = arith.constant 5 : index
    %213 = memref.load %arg1[%c5] : memref<8xf32, #tpu.memory_space<smem>>
    %214 = vector.broadcast %213 : f32 to vector<16x128xf32>
    %215 = arith.mulf %212, %214 : vector<16x128xf32>
    %216 = arith.addf %203, %215 : vector<16x128xf32>
    %217 = arith.mulf %208, %140 : vector<16x128xf32>
    %cst_74 = arith.constant 8.000000e-01 : f32
    %218 = vector.broadcast %cst_74 : f32 to vector<16x128xf32>
    %219 = arith.subf %0, %218 : vector<16x128xf32>
    %cst_75 = arith.constant 5.00000048 : f32
    %220 = vector.broadcast %cst_75 : f32 to vector<16x128xf32>
    %221 = arith.mulf %219, %220 : vector<16x128xf32>
    %cst_76 = arith.constant 1.000000e+00 : f32
    %222 = vector.broadcast %cst_76 : f32 to vector<16x128xf32>
    %223 = arith.subf %222, %221 : vector<16x128xf32>
    %224 = arith.mulf %223, %141 : vector<16x128xf32>
    %225 = arith.addf %217, %224 : vector<16x128xf32>
    %c6 = arith.constant 6 : index
    %226 = memref.load %arg1[%c6] : memref<8xf32, #tpu.memory_space<smem>>
    %227 = vector.broadcast %226 : f32 to vector<16x128xf32>
    %228 = arith.mulf %225, %227 : vector<16x128xf32>
    %229 = arith.addf %216, %228 : vector<16x128xf32>
    %230 = arith.mulf %221, %141 : vector<16x128xf32>
    %c7 = arith.constant 7 : index
    %231 = memref.load %arg1[%c7] : memref<8xf32, #tpu.memory_space<smem>>
    %232 = vector.broadcast %231 : f32 to vector<16x128xf32>
    %233 = arith.mulf %230, %232 : vector<16x128xf32>
    %234 = arith.addf %229, %233 : vector<16x128xf32>
    %c0_77 = arith.constant 0 : index
    %c0_78 = arith.constant 0 : index
    %235 = vector.load %arg3[%c0_77, %c0_78] : memref<16x128xf32, #tpu.memory_space<vmem>>, vector<16x128xf32>
    tpu.vector_store %arg3[%c0_77, %c0_78], %234 {strides = array<i32>} : memref<16x128xf32, #tpu.memory_space<vmem>>, vector<16x128xf32>,
    return
  }
  func.func @transform_0(%arg0: i32) -> i32 {
    %c0_i32 = arith.constant 0 : i32
    %c0_i32_0 = arith.constant 0 : i32
    return %c0_i32 : i32
  }
  func.func @transform_1(%arg0: i32) -> (i32, i32) {
    %c0_i32 = arith.constant 0 : i32
    %c0_i32_0 = arith.constant 0 : i32
    return %arg0, %c0_i32 : i32, i32
  }
  func.func @transform_2(%arg0: i32) -> (i32, i32) {
    %c0_i32 = arith.constant 0 : i32
    %c0_i32_0 = arith.constant 0 : i32
    return %arg0, %c0_i32 : i32, i32
  }
}

</mosaic_0001>

<llo_original>
// kernel: tpu_custom_call.1
$region0: #{tpu_custom_call.1}
  #allocation0 [shape = 'u32[]', space=smem, size = 0x4, offset = 0x4, fixed_abs, tag = 'smem constant byte address 0x4 - core index']
  #allocation1 [shape = 'u32[144,128]{1,0:T(1,128)}', space=vmem, size = 0x12000, scoped, tag = 'internal scratch']
  %s0 = inlined_call_operand.hbm [shape: f32[8], index: 0, kind: input, shape index: {}]
  %s1 = inlined_call_operand.hbm [shape: f32[16,128], index: 1, kind: input, shape index: {}]
  %s2 = inlined_call_operand.hbm [shape: f32[16,128], index: 2, kind: output, shape index: {}]
  %s3 = sld [smem:[#allocation0]]
  $region26: #{tpu_custom_call.1} parent=0
    _
  %s5 = ssub.s32 1, %s3
  %s6 = scalar_select 0, %s5, %s3
  $region1: #{tpu_custom_call.1} parent=0
    #allocation2 [shape = 'u8[512]{0}', space=smem, size = 0x200, scoped, tag = 'input window, operand 0, single buffered']
    #allocation3 [shape = 's32[1]{0}', space=sflag, size = 0x4, scoped, tag = 'scoped memory for tpu_custom_call.1']
    #allocation4 [shape = 's32[1]{0}', space=sflag, size = 0x4, scoped, tag = 'scoped memory for tpu_custom_call.1']
    #allocation5 [shape = 's32[1]{0}', space=sflag, size = 0x4, scoped, tag = 'scoped memory for tpu_custom_call.1']
    #allocation6 [shape = 'u8[8192]{0}', space=vmem, size = 0x2000, scoped, tag = 'input window, operand 1, single buffered']
    #allocation7 [shape = 'u8[8192]{0}', space=vmem, size = 0x2000, scoped, tag = 'output window, operand 0, single buffered']
    %7 = vsyncpa [#allocation5], 0
    %8 = vsyncpa [#allocation3], 0
    %9 = vsyncpa [#allocation4], 0
    // Predicated region
    $region2: #{tpu_custom_call.1} parent=1 // pred_check
      _
    $region3: #{tpu_custom_call.1} parent=1 // pred_check_branch
      %11 = sbr.rel (0) target = $region5
    $region4: #{tpu_custom_call.1} parent=1 // pred_region
      %s13 = ssub.s32 16, 16
      %14 = vsyncadd [#allocation5], %s13
      %17 = dma.hbm_to_smem %s0, 16, [#allocation2], [#allocation5]
    $region5: #{tpu_custom_call.1} parent=1 // pred_fallthru
      _
    // Predicated region
    $region6: #{tpu_custom_call.1} parent=1 // pred_check
      _
    $region7: #{tpu_custom_call.1} parent=1 // pred_check_branch
      %19 = sbr.rel (0) target = $region9
    $region8: #{tpu_custom_call.1} parent=1 // pred_region
      %s21 = ssub.s32 256, 256
      %22 = vsyncadd [#allocation3], %s21
      %s23 = sshll.u32 [#allocation6], 4
      %s24 = int_to_ptr.vmem [resolvable:$true] %s23
      %29 = dma.hbm_to_vmem [thread:$0]  %s1, 256, %s24, [#allocation3], 128, 128, 8
    $region9: #{tpu_custom_call.1} parent=1 // pred_fallthru
      _
    // Predicated region
    $region10: #{tpu_custom_call.1} parent=1 // pred_check
      _
    $region11: #{tpu_custom_call.1} parent=1 // pred_check_branch
      %31 = sbr.rel (0) target = $region13
    $region12: #{tpu_custom_call.1} parent=1 // pred_region
      %32 = dma.done [#allocation5], 16
    $region13: #{tpu_custom_call.1} parent=1 // pred_fallthru
      _
    // Predicated region
    $region14: #{tpu_custom_call.1} parent=1 // pred_check
      _
    $region15: #{tpu_custom_call.1} parent=1 // pred_check_branch
      %34 = sbr.rel (0) target = $region17
    $region16: #{tpu_custom_call.1} parent=1 // pred_region
      %35 = dma.done [#allocation3], 256
    $region17: #{tpu_custom_call.1} parent=1 // pred_fallthru
      _
    %36 = sfence
    %v37 = vld [vmem:[#allocation6] sm:$0xff]
    %v38 = vld [vmem:[#allocation6 + $0x8] sm:$0xff]
    %vm39 = vcmp.ge.f32.partialorder %v37, 0.0
    %vm40 = vcmp.ge.f32.partialorder %v38, 0.0
    %vm41 = vcmp.lt.f32.partialorder %v37, 0.2
    %vm42 = vcmp.lt.f32.partialorder %v38, 0.2
    %vm43 = vmand %vm39, %vm41
    %vm44 = vmand %vm40, %vm42
    %v45 = vsel %vm43, 1.0, 0.0
    %v46 = vsel %vm44, 1.0, 0.0
    %vm47 = vcmp.ge.f32.partialorder %v37, 0.2
    %vm48 = vcmp.ge.f32.partialorder %v38, 0.2
    %vm49 = vcmp.lt.f32.partialorder %v37, 0.4
    %vm50 = vcmp.lt.f32.partialorder %v38, 0.4
    %vm51 = vmand %vm47, %vm49
    %vm52 = vmand %vm48, %vm50
    %v53 = vsel %vm51, 1.0, 0.0
    %v54 = vsel %vm52, 1.0, 0.0
    %vm55 = vcmp.ge.f32.partialorder %v37, 0.4
    %vm56 = vcmp.ge.f32.partialorder %v38, 0.4
    %vm57 = vcmp.lt.f32.partialorder %v37, 0.6
    %vm58 = vcmp.lt.f32.partialorder %v38, 0.6
    %vm59 = vmand %vm55, %vm57
    %vm60 = vmand %vm56, %vm58
    %v61 = vsel %vm59, 1.0, 0.0
    %v62 = vsel %vm60, 1.0, 0.0
    %vm63 = vcmp.ge.f32.partialorder %v37, 0.6
    %vm64 = vcmp.ge.f32.partialorder %v38, 0.6
    %vm65 = vcmp.lt.f32.partialorder %v37, 0.8
    %vm66 = vcmp.lt.f32.partialorder %v38, 0.8
    %vm67 = vmand %vm63, %vm65
    %vm68 = vmand %vm64, %vm66
    %v69 = vsel %vm67, 1.0, 0.0
    %v70 = vsel %vm68, 1.0, 0.0
    %vm71 = vcmp.ge.f32.partialorder %v37, 0.8
    %vm72 = vcmp.ge.f32.partialorder %v38, 0.8
    %vm73 = vcmp.lt.f32.partialorder %v37, 1.0
    %vm74 = vcmp.lt.f32.partialorder %v38, 1.0
    %vm75 = vmand %vm71, %vm73
    %vm76 = vmand %vm72, %vm74
    %v77 = vsel %vm75, 1.0, 0.0
    %v78 = vsel %vm76, 1.0, 0.0
    %vm79 = vcmp.eq.f32.partialorder %v37, 1.0
    %vm80 = vcmp.eq.f32.partialorder %v38, 1.0
    %v81 = vsel %vm79, 1.0, %v77
    %v82 = vsel %vm80, 1.0, %v78
    %v83 = vmul.f32 %v37, 5.0
    %v84 = vmul.f32 %v38, 5.0
    %v85 = vsub.f32 1.0, %v83
    %v86 = vsub.f32 1.0, %v84
    %v87 = vmul.f32 %v85, %v45
    %v88 = vmul.f32 %v86, %v46
    %v89 = vmul.f32 %v83, %v45
    %v90 = vmul.f32 %v84, %v46
    %v91 = vsub.f32 %v37, 0.2
    %v92 = vsub.f32 %v38, 0.2
    %v93 = vmul.f32 %v91, 5.0
    %v94 = vmul.f32 %v92, 5.0
    %v95 = vsub.f32 1.0, %v93
    %v96 = vsub.f32 1.0, %v94
    %v97 = vmul.f32 %v95, %v53
    %v98 = vmul.f32 %v96, %v54
    %v99 = vadd.f32 %v89, %v97
    %v100 = vadd.f32 %v90, %v98
    %v101 = vmul.f32 %v93, %v53
    %v102 = vmul.f32 %v94, %v54
    %v103 = vsub.f32 %v37, 0.4
    %v104 = vsub.f32 %v38, 0.4
    %v105 = vmul.f32 %v103, 4.9999995
    %v106 = vmul.f32 %v104, 4.9999995
    %v107 = vsub.f32 1.0, %v105
    %v108 = vsub.f32 1.0, %v106
    %v109 = vmul.f32 %v107, %v61
    %v110 = vmul.f32 %v108, %v62
    %v111 = vadd.f32 %v101, %v109
    %v112 = vadd.f32 %v102, %v110
    %v113 = vmul.f32 %v105, %v61
    %v114 = vmul.f32 %v106, %v62
    %v115 = vsub.f32 %v37, 0.6
    %v116 = vsub.f32 %v38, 0.6
    %v117 = vmul.f32 %v115, 5.0000005
    %v118 = vmul.f32 %v116, 5.0000005
    %v119 = vsub.f32 1.0, %v117
    %v120 = vsub.f32 1.0, %v118
    %v121 = vmul.f32 %v119, %v69
    %v122 = vmul.f32 %v120, %v70
    %v123 = vadd.f32 %v113, %v121
    %v124 = vadd.f32 %v114, %v122
    %v125 = vmul.f32 %v117, %v69
    %v126 = vmul.f32 %v118, %v70
    %v127 = vsub.f32 %v37, 0.8
    %v128 = vsub.f32 %v38, 0.8
    %v129 = vmul.f32 %v127, 5.0000005
    %v130 = vmul.f32 %v128, 5.0000005
    %v131 = vsub.f32 1.0, %v129
    %v132 = vsub.f32 1.0, %v130
    %v133 = vmul.f32 %v131, %v81
    %v134 = vmul.f32 %v132, %v82
    %v135 = vadd.f32 %v125, %v133
    %v136 = vadd.f32 %v126, %v134
    %v137 = vmul.f32 %v129, %v81
    %v138 = vmul.f32 %v130, %v82
    %v139 = vmul.f32 %v85, %v87
    %v140 = vmul.f32 %v86, %v88
    %v141 = vmul.f32 %v83, %v87
    %v142 = vmul.f32 %v84, %v88
    %v143 = vmul.f32 %v37, 2.5
    %v144 = vmul.f32 %v38, 2.5
    %v145 = vsub.f32 1.0, %v143
    %v146 = vsub.f32 1.0, %v144
    %v147 = vmul.f32 %v145, %v99
    %v148 = vmul.f32 %v146, %v100
    %v149 = vadd.f32 %v141, %v147
    %v150 = vadd.f32 %v142, %v148
    %v151 = vmul.f32 %v143, %v99
    %v152 = vmul.f32 %v144, %v100
    %v153 = vmul.f32 %v91, 2.4999998
    %v154 = vmul.f32 %v92, 2.4999998
    %v155 = vsub.f32 1.0, %v153
    %v156 = vsub.f32 1.0, %v154
    %v157 = vmul.f32 %v155, %v111
    %v158 = vmul.f32 %v156, %v112
    %v159 = vadd.f32 %v151, %v157
    %v160 = vadd.f32 %v152, %v158
    %v161 = vmul.f32 %v153, %v111
    %v162 = vmul.f32 %v154, %v112
    %v163 = vmul.f32 %v103, 2.5
    %v164 = vmul.f32 %v104, 2.5
    %v165 = vsub.f32 1.0, %v163
    %v166 = vsub.f32 1.0, %v164
    %v167 = vmul.f32 %v165, %v123
    %v168 = vmul.f32 %v166, %v124
    %v169 = vadd.f32 %v161, %v167
    %v170 = vadd.f32 %v162, %v168
    %v171 = vmul.f32 %v163, %v123
    %v172 = vmul.f32 %v164, %v124
    %v173 = vmul.f32 %v115, 2.5000002
    %v174 = vmul.f32 %v116, 2.5000002
    %v175 = vsub.f32 1.0, %v173
    %v176 = vsub.f32 1.0, %v174
    %v177 = vmul.f32 %v175, %v135
    %v178 = vmul.f32 %v176, %v136
    %v179 = vadd.f32 %v171, %v177
    %v180 = vadd.f32 %v172, %v178
    %v181 = vmul.f32 %v173, %v135
    %v182 = vmul.f32 %v174, %v136
    %v183 = vmul.f32 %v131, %v137
    %v184 = vmul.f32 %v132, %v138
    %v185 = vadd.f32 %v181, %v183
    %v186 = vadd.f32 %v182, %v184
    %v187 = vmul.f32 %v129, %v137
    %v188 = vmul.f32 %v130, %v138
    %v189 = vmul.f32 %v85, %v139
    %v190 = vmul.f32 %v86, %v140
    %s191 = sld [smem:[#allocation2]]
    %v192 = vstv %s191
    %v193 = vmul.f32 %v189, %v192
    %v194 = vmul.f32 %v190, %v192
    %v195 = vmul.f32 %v83, %v139
    %v196 = vmul.f32 %v84, %v140
    %v197 = vmul.f32 %v145, %v149
    %v198 = vmul.f32 %v146, %v150
    %v199 = vadd.f32 %v195, %v197
    %v200 = vadd.f32 %v196, %v198
    %s201 = sld [smem:[#allocation2 + $0x1]]
    %v202 = vstv %s201
    %v203 = vmul.f32 %v199, %v202
    %v204 = vmul.f32 %v200, %v202
    %v205 = vadd.f32 %v193, %v203
    %v206 = vadd.f32 %v194, %v204
    %v207 = vmul.f32 %v143, %v149
    %v208 = vmul.f32 %v144, %v150
    %v209 = vmul.f32 %v37, 1.6666666
    %v210 = vmul.f32 %v38, 1.6666666
    %v211 = vsub.f32 1.0, %v209
    %v212 = vsub.f32 1.0, %v210
    %v213 = vmul.f32 %v211, %v159
    %v214 = vmul.f32 %v212, %v160
    %v215 = vadd.f32 %v207, %v213
    %v216 = vadd.f32 %v208, %v214
    %s217 = sld [smem:[#allocation2 + $0x2]]
    %v218 = vstv %s217
    %v219 = vmul.f32 %v215, %v218
    %v220 = vmul.f32 %v216, %v218
    %v221 = vadd.f32 %v205, %v219
    %v222 = vadd.f32 %v206, %v220
    %v223 = vmul.f32 %v209, %v159
    %v224 = vmul.f32 %v210, %v160
    %v225 = vmul.f32 %v91, 1.6666666
    %v226 = vmul.f32 %v92, 1.6666666
    %v227 = vsub.f32 1.0, %v225
    %v228 = vsub.f32 1.0, %v226
    %v229 = vmul.f32 %v227, %v169
    %v230 = vmul.f32 %v228, %v170
    %v231 = vadd.f32 %v223, %v229
    %v232 = vadd.f32 %v224, %v230
    %s233 = sld [smem:[#allocation2 + $0x3]]
    %v234 = vstv %s233
    %v235 = vmul.f32 %v231, %v234
    %v236 = vmul.f32 %v232, %v234
    %v237 = vadd.f32 %v221, %v235
    %v238 = vadd.f32 %v222, %v236
    %v239 = vmul.f32 %v225, %v169
    %v240 = vmul.f32 %v226, %v170
    %v241 = vmul.f32 %v103, 1.6666666
    %v242 = vmul.f32 %v104, 1.6666666
    %v243 = vsub.f32 1.0, %v241
    %v244 = vsub.f32 1.0, %v242
    %v245 = vmul.f32 %v243, %v179
    %v246 = vmul.f32 %v244, %v180
    %v247 = vadd.f32 %v239, %v245
    %v248 = vadd.f32 %v240, %v246
    %s249 = sld [smem:[#allocation2 + $0x4]]
    %v250 = vstv %s249
    %v251 = vmul.f32 %v247, %v250
    %v252 = vmul.f32 %v248, %v250
    %v253 = vadd.f32 %v237, %v251
    %v254 = vadd.f32 %v238, %v252
    %v255 = vmul.f32 %v241, %v179
    %v256 = vmul.f32 %v242, %v180
    %v257 = vmul.f32 %v175, %v185
    %v258 = vmul.f32 %v176, %v186
    %v259 = vadd.f32 %v255, %v257
    %v260 = vadd.f32 %v256, %v258
    %s261 = sld [smem:[#allocation2 + $0x5]]
    %v262 = vstv %s261
    %v263 = vmul.f32 %v259, %v262
    %v264 = vmul.f32 %v260, %v262
    %v265 = vadd.f32 %v253, %v263
    %v266 = vadd.f32 %v254, %v264
    %v267 = vmul.f32 %v173, %v185
    %v268 = vmul.f32 %v174, %v186
    %v269 = vmul.f32 %v131, %v187
    %v270 = vmul.f32 %v132, %v188
    %v271 = vadd.f32 %v267, %v269
    %v272 = vadd.f32 %v268, %v270
    %s273 = sld [smem:[#allocation2 + $0x6]]
    %v274 = vstv %s273
    %v275 = vmul.f32 %v271, %v274
    %v276 = vmul.f32 %v272, %v274
    %v277 = vadd.f32 %v265, %v275
    %v278 = vadd.f32 %v266, %v276
    %v279 = vmul.f32 %v129, %v187
    %v280 = vmul.f32 %v130, %v188
    %s281 = sld [smem:[#allocation2 + $0x7]]
    %v282 = vstv %s281
    %v283 = vmul.f32 %v279, %v282
    %v284 = vmul.f32 %v280, %v282
    %v285 = vadd.f32 %v277, %v283
    %v286 = vadd.f32 %v278, %v284
    %287 = vst [vmem:[#allocation7] sm:$0xff] %v285
    %288 = vst [vmem:[#allocation7 + $0x8] sm:$0xff] %v286
    // Predicated region
    $region18: #{tpu_custom_call.1} parent=1 // pred_check
      _
    $region19: #{tpu_custom_call.1} parent=1 // pred_check_branch
      %290 = sbr.rel (0) target = $region21
    $region20: #{tpu_custom_call.1} parent=1 // pred_region
      %s292 = ssub.s32 256, 256
      %293 = vsyncadd [#allocation4], %s292
      %s294 = sshll.u32 [#allocation7], 4
      %s295 = int_to_ptr.vmem [resolvable:$true] %s294
      %300 = dma.vmem_to_hbm [thread:$0]  %s295, 256, %s2, [#allocation4], 128, 128, 8
    $region21: #{tpu_custom_call.1} parent=1 // pred_fallthru
      _
    // Predicated region
    $region22: #{tpu_custom_call.1} parent=1 // pred_check
      _
    $region23: #{tpu_custom_call.1} parent=1 // pred_check_branch
      %302 = sbr.rel (0) target = $region25
    $region24: #{tpu_custom_call.1} parent=1 // pred_region
      %303 = dma.done [#allocation4], 256
    $region25: #{tpu_custom_call.1} parent=1 // pred_fallthru
      _
    %304 = vsyncpa [#allocation3], 1
    %305 = vsyncpa [#allocation4], 1
    %306 = vsyncpa [#allocation5], 1

</llo_original>
